<compile_context>
chip_gen: v6e
topology: v6e:2x2x1
jax: 0.10.0
libtpu: 0.0.40
codegen_flags: <defaults>
</compile_context>

<pallas_src>
import functools

import jax
import jax.numpy as jnp
from jax.experimental import pallas as pl
from jax.experimental.pallas import tpu as pltpu

EPS = 1e-5

# Row indices inside the packed (8, P) BN/bias parameter block.
_ROW_G1, _ROW_BETA1, _ROW_G2, _ROW_BETA2, _ROW_B3 = 0, 1, 2, 3, 4


def mlp_pred_kernel(x_ref, w1_ref, w2_ref, w3_ref, bnp_ref, o_ref):
    # Cast x to bf16 in-kernel (data is already in VMEM; hidden under MXU/DMA slack).
    x = x_ref[...].astype(jnp.bfloat16)
    inv_n = 1.0 / x_ref.shape[0]

    g1 = bnp_ref[_ROW_G1:_ROW_G1 + 1, :]
    beta1 = bnp_ref[_ROW_BETA1:_ROW_BETA1 + 1, :]
    g2 = bnp_ref[_ROW_G2:_ROW_G2 + 1, :]
    beta2 = bnp_ref[_ROW_BETA2:_ROW_BETA2 + 1, :]
    b3 = bnp_ref[_ROW_B3:_ROW_B3 + 1, :]

    def bn_relu(h, g, beta):
        # One-pass batch statistics: var = E[h^2] - mu^2. The clamp guards tiny
        # negative f32 round-off. Zero-padded columns: mu=var=0, g=beta=0 -> s=t=0,
        # so padded lanes stay exactly 0.
        mu = jnp.sum(h, axis=0, keepdims=True) * inv_n
        ex2 = jnp.sum(h * h, axis=0, keepdims=True) * inv_n
        var = jnp.maximum(ex2 - mu * mu, 0.0)
        s = g * jax.lax.rsqrt(var + EPS)
        t = beta - mu * s
        return jnp.maximum(h * s + t, 0.0)

    # ---- Linear 1 (bias exactly cancelled by training-mode BN) + BN + ReLU ----
    h = jnp.dot(x, w1_ref[...], preferred_element_type=jnp.float32)
    h = bn_relu(h, g1, beta1)

    # ---- Linear 2 (bias cancelled) + BN + ReLU ----
    h = jnp.dot(h.astype(jnp.bfloat16), w2_ref[...],
                preferred_element_type=jnp.float32)
    h = bn_relu(h, g2, beta2)

    # ---- Linear 3 (output head, bias kept) ----
    out = jnp.dot(h.astype(jnp.bfloat16), w3_ref[...],
                  preferred_element_type=jnp.float32) + b3
    o_ref[...] = out.astype(o_ref.dtype)


def _round_up(n, m):
    return ((n + m - 1) // m) * m


def _pad_to(a, shape):
    return jnp.pad(a, [(0, s - d) for s, d in zip(shape, a.shape)])


def _vmem_limit_bytes():
    # Raise well above the scoped default so large batches stay VMEM-resident on
    # v5e/v6e (128 MiB physical), capped at ~75% of physical for v7x's 64 MiB.
    fallback = 64 * 1024 * 1024
    try:
        cap = getattr(pltpu.get_tpu_info(), "vmem_capacity_bytes", fallback)
    except Exception:
        cap = fallback
    return int(min(100 * 1024 * 1024, cap * 3 // 4))


_VMEM_LIMIT = _vmem_limit_bytes()


def prepare_params(params):
    """One-time padding + bf16 cast of the weights and packing of the BN/bias
    vectors. Call once at init and reuse the result for every forward call."""
    (w1, b1, g1, beta1, w2, b2, g2, beta2, w3, b3) = params
    del b1, b2  # exactly cancelled by training-mode BN mean subtraction

    inp_dim, hidden_dim = w1.shape
    out_dim = w3.shape[1]
    # Common 128-lane-aligned feature width so hidden/output share one padding and
    # the five (1, C) params can live as rows of a single (8, P) block.
    P = max(_round_up(hidden_dim, 128), _round_up(out_dim, 128), 128)

    w1_p = _pad_to(w1, (inp_dim, P)).astype(jnp.bfloat16)
    w2_p = _pad_to(w2, (P, P)).astype(jnp.bfloat16)
    w3_p = _pad_to(w3, (P, P)).astype(jnp.bfloat16)

    # Zero padding keeps padded feature lanes exactly 0 through BN + ReLU + head.
    bn_pack = jnp.zeros((8, P), jnp.float32)
    bn_pack = bn_pack.at[_ROW_G1, :hidden_dim].set(g1.reshape(-1))
    bn_pack = bn_pack.at[_ROW_BETA1, :hidden_dim].set(beta1.reshape(-1))
    bn_pack = bn_pack.at[_ROW_G2, :hidden_dim].set(g2.reshape(-1))
    bn_pack = bn_pack.at[_ROW_BETA2, :hidden_dim].set(beta2.reshape(-1))
    bn_pack = bn_pack.at[_ROW_B3, :out_dim].set(b3.reshape(-1))

    prepared = (w1_p, w2_p, w3_p, bn_pack)
    prepared = jax.tree_util.tree_map(jax.block_until_ready, prepared)
    return prepared, out_dim


@functools.partial(jax.jit, static_argnames=("out_dim",))
def mlp_pred_pallas(x, w1_p, w2_p, w3_p, bn_pack, *, out_dim):
    n, inp_dim = x.shape
    P = w1_p.shape[1]

    flops = 2 * n * (inp_dim * P + P * P + P * P)
    bytes_accessed = (x.size * 4
                      + (w1_p.size + w2_p.size + w3_p.size) * 2
                      + bn_pack.size * 4
                      + n * P * 4)

    vmem = pl.BlockSpec(memory_space=pltpu.MemorySpace.VMEM)
    out_p = pl.pallas_call(
        mlp_pred_kernel,
        out_shape=jax.ShapeDtypeStruct((n, P), jnp.float32),
        in_specs=[vmem] * 5,
        out_specs=vmem,
        compiler_params=pltpu.CompilerParams(vmem_limit_bytes=_VMEM_LIMIT),
        cost_estimate=pl.CostEstimate(flops=flops,
                                      transcendentals=2 * P,
                                      bytes_accessed=bytes_accessed),
    )(x, w1_p, w2_p, w3_p, bn_pack)
    return out_p[:, :out_dim]


def init_params(key, inp_dim, hidden_dim, out_dim):
    """Deterministic init mimicking PyTorch Linear defaults (uniform +/- 1/sqrt(fan_in))
    and BatchNorm1d defaults (gamma=1, beta=0)."""
    ks = jax.random.split(key, 6)

    def linear(kw, kb, fan_in, fan_out):
        bound = 1.0 / jnp.sqrt(fan_in)
        w = jax.random.uniform(kw, (fan_in, fan_out), jnp.float32, -bound, bound)
        b = jax.random.uniform(kb, (1, fan_out), jnp.float32, -bound, bound)
        return w, b

    w1, b1 = linear(ks[0], ks[1], inp_dim, hidden_dim)
    w2, b2 = linear(ks[2], ks[3], hidden_dim, hidden_dim)
    w3, b3 = linear(ks[4], ks[5], hidden_dim, out_dim)

    g1 = jnp.ones((1, hidden_dim), jnp.float32)
    beta1 = jnp.zeros((1, hidden_dim), jnp.float32)
    g2 = jnp.ones((1, hidden_dim), jnp.float32)
    beta2 = jnp.zeros((1, hidden_dim), jnp.float32)

    return (w1, b1, g1, beta1, w2, b2, g2, beta2, w3, b3)


def mlp_pred_ref(x, params):
    """PyTorch-faithful structure (biases kept, unfolded training-mode BN) with the
    same bf16-operand / f32-accumulation matmul precision the kernel uses."""
    (w1, b1, g1, beta1, w2, b2, g2, beta2, w3, b3) = params

    def mm(a, w):
        return jnp.dot(a.astype(jnp.bfloat16), w.astype(jnp.bfloat16),
                       preferred_element_type=jnp.float32)

    def bn(h, g, beta):
        mu = jnp.mean(h, axis=0, keepdims=True)
        var = jnp.mean((h - mu) ** 2, axis=0, keepdims=True)
        return (h - mu) / jnp.sqrt(var + EPS) * g + beta

    h = jnp.maximum(bn(mm(x, w1) + b1, g1, beta1), 0.0)
    h = jnp.maximum(bn(mm(h, w2) + b2, g2, beta2), 0.0)
    return mm(h, w3) + b3


if __name__ == "__main__":
    key = jax.random.PRNGKey(0)
    k_x, k_p = jax.random.split(key)

    # batch = 16 keeps the bf16 sublane packing dense (multiple of 16).
    batch, inp_dim, hidden_dim, out_dim = 16, 16, 32, 8
    x = jax.random.normal(k_x, (batch, inp_dim), jnp.float32)
    params = init_params(k_p, inp_dim, hidden_dim, out_dim)

    # One-time prep (padding + bf16 cast + BN/bias packing) outside the hot path.
    (w1_p, w2_p, w3_p, bn_pack), out_dim_p = prepare_params(params)

    out = jax.block_until_ready(
        mlp_pred_pallas(x, w1_p, w2_p, w3_p, bn_pack, out_dim=out_dim_p))
    ref = mlp_pred_ref(x, params)

    assert out.shape == (batch, out_dim)
    # bf16 matmul operands (f32 accumulation) => bf16-appropriate tolerance.
    assert jnp.allclose(out, ref, atol=2e-2, rtol=2e-2)

    print("KERNEL_OK")
</pallas_src>

<mosaic_0001>
module attributes {stable_mosaic.version = 11 : i64} {
  func.func @mlp_pred_kernel(%arg0: memref<16x16xf32, #tpu.memory_space<vmem>>, %arg1: memref<16x128xbf16, #tpu.memory_space<vmem>>, %arg2: memref<128x128xbf16, #tpu.memory_space<vmem>>, %arg3: memref<128x128xbf16, #tpu.memory_space<vmem>>, %arg4: memref<8x128xf32, #tpu.memory_space<vmem>>, %arg5: memref<16x128xf32, #tpu.memory_space<vmem>>) attributes {dimension_semantics = [], scalar_prefetch = 0 : i64, scratch_operands = 0 : i64, tpu.core_type = #tpu.core_type<tc>} {
    %c0 = arith.constant 0 : index
    %c0_0 = arith.constant 0 : index
    %0 = vector.load %arg0[%c0, %c0_0] : memref<16x16xf32, #tpu.memory_space<vmem>>, vector<16x16xf32>
    %1 = arith.truncf %0 : vector<16x16xf32> to vector<16x16xbf16>
    %c0_1 = arith.constant 0 : index
    %c0_2 = arith.constant 0 : index
    %2 = vector.load %arg4[%c0_1, %c0_2] : memref<8x128xf32, #tpu.memory_space<vmem>>, vector<1x128xf32>
    %c1 = arith.constant 1 : index
    %c0_3 = arith.constant 0 : index
    %3 = vector.load %arg4[%c1, %c0_3] : memref<8x128xf32, #tpu.memory_space<vmem>>, vector<1x128xf32>
    %c2 = arith.constant 2 : index
    %c0_4 = arith.constant 0 : index
    %4 = vector.load %arg4[%c2, %c0_4] : memref<8x128xf32, #tpu.memory_space<vmem>>, vector<1x128xf32>
    %c3 = arith.constant 3 : index
    %c0_5 = arith.constant 0 : index
    %5 = vector.load %arg4[%c3, %c0_5] : memref<8x128xf32, #tpu.memory_space<vmem>>, vector<1x128xf32>
    %c4 = arith.constant 4 : index
    %c0_6 = arith.constant 0 : index
    %6 = vector.load %arg4[%c4, %c0_6] : memref<8x128xf32, #tpu.memory_space<vmem>>, vector<1x128xf32>
    %c0_7 = arith.constant 0 : index
    %c0_8 = arith.constant 0 : index
    %7 = vector.load %arg1[%c0_7, %c0_8] : memref<16x128xbf16, #tpu.memory_space<vmem>>, vector<16x128xbf16>
    %cst = arith.constant dense<0.000000e+00> : vector<16x128xf32>
    %8 = tpu.matmul %1, %7, %cst {dimension_numbers = #tpu.dot_dimension_numbers<[1], [0], [0], [1], [0, 0, 1, 1], [], []>} : vector<16x16xbf16>, vector<16x128xbf16>, vector<16x128xf32> -> vector<16x128xf32>
    %cst_9 = arith.constant dense<0.000000e+00> : vector<128xf32>
    %9 = vector.multi_reduction <add>, %8, %cst_9 [0] : vector<16x128xf32> to vector<128xf32>
    %10 = vector.shape_cast %9 : vector<128xf32> to vector<1x128xf32>
    %cst_10 = arith.constant 6.250000e-02 : f32
    %11 = vector.broadcast %cst_10 : f32 to vector<1x128xf32>
    %12 = arith.mulf %10, %11 : vector<1x128xf32>
    %13 = arith.mulf %8, %8 : vector<16x128xf32>
    %cst_11 = arith.constant dense<0.000000e+00> : vector<128xf32>
    %14 = vector.multi_reduction <add>, %13, %cst_11 [0] : vector<16x128xf32> to vector<128xf32>
    %15 = vector.shape_cast %14 : vector<128xf32> to vector<1x128xf32>
    %cst_12 = arith.constant 6.250000e-02 : f32
    %16 = vector.broadcast %cst_12 : f32 to vector<1x128xf32>
    %17 = arith.mulf %15, %16 : vector<1x128xf32>
    %18 = arith.mulf %12, %12 : vector<1x128xf32>
    %19 = arith.subf %17, %18 : vector<1x128xf32>
    %cst_13 = arith.constant 0.000000e+00 : f32
    %20 = vector.broadcast %cst_13 : f32 to vector<1x128xf32>
    %21 = arith.maximumf %19, %20 : vector<1x128xf32>
    %cst_14 = arith.constant 9.99999974E-6 : f32
    %22 = vector.broadcast %cst_14 : f32 to vector<1x128xf32>
    %23 = arith.addf %21, %22 : vector<1x128xf32>
    %24 = math.rsqrt %23 : vector<1x128xf32>
    %25 = arith.mulf %2, %24 : vector<1x128xf32>
    %26 = arith.mulf %12, %25 : vector<1x128xf32>
    %27 = arith.subf %3, %26 : vector<1x128xf32>
    %28 = vector.broadcast %25 : vector<1x128xf32> to vector<16x128xf32>
    %29 = arith.mulf %8, %28 : vector<16x128xf32>
    %30 = vector.broadcast %27 : vector<1x128xf32> to vector<16x128xf32>
    %31 = arith.addf %29, %30 : vector<16x128xf32>
    %cst_15 = arith.constant 0.000000e+00 : f32
    %32 = vector.broadcast %cst_15 : f32 to vector<16x128xf32>
    %33 = arith.maximumf %31, %32 : vector<16x128xf32>
    %34 = arith.truncf %33 : vector<16x128xf32> to vector<16x128xbf16>
    %c0_16 = arith.constant 0 : index
    %c0_17 = arith.constant 0 : index
    %35 = vector.load %arg2[%c0_16, %c0_17] : memref<128x128xbf16, #tpu.memory_space<vmem>>, vector<128x128xbf16>
    %cst_18 = arith.constant dense<0.000000e+00> : vector<16x128xf32>
    %36 = tpu.matmul %34, %35, %cst_18 {dimension_numbers = #tpu.dot_dimension_numbers<[1], [0], [0], [1], [0, 0, 1, 1], [], []>} : vector<16x128xbf16>, vector<128x128xbf16>, vector<16x128xf32> -> vector<16x128xf32>
    %cst_19 = arith.constant dense<0.000000e+00> : vector<128xf32>
    %37 = vector.multi_reduction <add>, %36, %cst_19 [0] : vector<16x128xf32> to vector<128xf32>
    %38 = vector.shape_cast %37 : vector<128xf32> to vector<1x128xf32>
    %cst_20 = arith.constant 6.250000e-02 : f32
    %39 = vector.broadcast %cst_20 : f32 to vector<1x128xf32>
    %40 = arith.mulf %38, %39 : vector<1x128xf32>
    %41 = arith.mulf %36, %36 : vector<16x128xf32>
    %cst_21 = arith.constant dense<0.000000e+00> : vector<128xf32>
    %42 = vector.multi_reduction <add>, %41, %cst_21 [0] : vector<16x128xf32> to vector<128xf32>
    %43 = vector.shape_cast %42 : vector<128xf32> to vector<1x128xf32>
    %cst_22 = arith.constant 6.250000e-02 : f32
    %44 = vector.broadcast %cst_22 : f32 to vector<1x128xf32>
    %45 = arith.mulf %43, %44 : vector<1x128xf32>
    %46 = arith.mulf %40, %40 : vector<1x128xf32>
    %47 = arith.subf %45, %46 : vector<1x128xf32>
    %cst_23 = arith.constant 0.000000e+00 : f32
    %48 = vector.broadcast %cst_23 : f32 to vector<1x128xf32>
    %49 = arith.maximumf %47, %48 : vector<1x128xf32>
    %cst_24 = arith.constant 9.99999974E-6 : f32
    %50 = vector.broadcast %cst_24 : f32 to vector<1x128xf32>
    %51 = arith.addf %49, %50 : vector<1x128xf32>
    %52 = math.rsqrt %51 : vector<1x128xf32>
    %53 = arith.mulf %4, %52 : vector<1x128xf32>
    %54 = arith.mulf %40, %53 : vector<1x128xf32>
    %55 = arith.subf %5, %54 : vector<1x128xf32>
    %56 = vector.broadcast %53 : vector<1x128xf32> to vector<16x128xf32>
    %57 = arith.mulf %36, %56 : vector<16x128xf32>
    %58 = vector.broadcast %55 : vector<1x128xf32> to vector<16x128xf32>
    %59 = arith.addf %57, %58 : vector<16x128xf32>
    %cst_25 = arith.constant 0.000000e+00 : f32
    %60 = vector.broadcast %cst_25 : f32 to vector<16x128xf32>
    %61 = arith.maximumf %59, %60 : vector<16x128xf32>
    %62 = arith.truncf %61 : vector<16x128xf32> to vector<16x128xbf16>
    %c0_26 = arith.constant 0 : index
    %c0_27 = arith.constant 0 : index
    %63 = vector.load %arg3[%c0_26, %c0_27] : memref<128x128xbf16, #tpu.memory_space<vmem>>, vector<128x128xbf16>
    %cst_28 = arith.constant dense<0.000000e+00> : vector<16x128xf32>
    %64 = tpu.matmul %62, %63, %cst_28 {dimension_numbers = #tpu.dot_dimension_numbers<[1], [0], [0], [1], [0, 0, 1, 1], [], []>} : vector<16x128xbf16>, vector<128x128xbf16>, vector<16x128xf32> -> vector<16x128xf32>
    %65 = vector.broadcast %6 : vector<1x128xf32> to vector<16x128xf32>
    %66 = arith.addf %64, %65 : vector<16x128xf32>
    %c0_29 = arith.constant 0 : index
    %c0_30 = arith.constant 0 : index
    %67 = vector.load %arg5[%c0_29, %c0_30] : memref<16x128xf32, #tpu.memory_space<vmem>>, vector<16x128xf32>
    tpu.vector_store %arg5[%c0_29, %c0_30], %66 {strides = array<i32>} : memref<16x128xf32, #tpu.memory_space<vmem>>, vector<16x128xf32>,
    return
  }
}

</mosaic_0001>

<llo_original>
// kernel: mlp_pred_pallas.1
$region0: #{mlp_pred_pallas.1}
  #allocation0 [shape = 'u32[]', space=smem, size = 0x4, offset = 0x4, fixed_abs, tag = 'smem constant byte address 0x4 - core index']
  #allocation1 [shape = 'u32[144,128]{1,0:T(1,128)}', space=vmem, size = 0x12000, scoped, tag = 'internal scratch']
  %s0 = inlined_call_operand.hbm [shape: f32[16,16], index: 0, kind: input, shape index: {}]
  %s1 = inlined_call_operand.hbm [shape: bf16[16,128], index: 1, kind: input, shape index: {}]
  %s2 = inlined_call_operand.hbm [shape: bf16[128,128], index: 2, kind: input, shape index: {}]
  %s3 = inlined_call_operand.hbm [shape: bf16[128,128], index: 3, kind: input, shape index: {}]
  %s4 = inlined_call_operand.hbm [shape: f32[8,128], index: 4, kind: input, shape index: {}]
  %s5 = inlined_call_operand.vmem [shape: f32[16,128], index: 5, kind: output, shape index: {}]
  %s6 = sld [smem:[#allocation0]]
  $region50: #{mlp_pred_pallas.1} parent=0
    _
  %s8 = ssub.s32 1, %s6
  %s9 = scalar_select 0, %s8, %s6
  $region1: #{mlp_pred_pallas.1} parent=0
    #allocation2 [shape = 'u8[8192]{0}', space=vmem, size = 0x2000, scoped, tag = 'input window, operand 0, single buffered']
    #allocation3 [shape = 's32[1]{0}', space=sflag, size = 0x4, scoped, tag = 'scoped memory for mlp_pred_pallas.1']
    #allocation4 [shape = 'u8[4096]{0}', space=vmem, size = 0x1000, scoped, tag = 'input window, operand 1, single buffered']
    #allocation5 [shape = 's32[1]{0}', space=sflag, size = 0x4, scoped, tag = 'scoped memory for mlp_pred_pallas.1']
    #allocation6 [shape = 'u8[32768]{0}', space=vmem, size = 0x8000, scoped, tag = 'input window, operand 2, single buffered']
    #allocation7 [shape = 'u8[32768]{0}', space=vmem, size = 0x8000, scoped, tag = 'input window, operand 3, single buffered']
    #allocation8 [shape = 's32[1]{0}', space=sflag, size = 0x4, scoped, tag = 'scoped memory for mlp_pred_pallas.1']
    #allocation9 [shape = 'u8[4096]{0}', space=vmem, size = 0x1000, scoped, tag = 'input window, operand 4, single buffered']
    %10 = vsyncpa [#allocation3], 0
    %11 = vsyncpa [#allocation5], 0
    %12 = vsyncpa [#allocation8], 0
    // Predicated region
    $region2: #{mlp_pred_pallas.1} parent=1 // pred_check
      _
    $region3: #{mlp_pred_pallas.1} parent=1 // pred_check_branch
      %14 = sbr.rel (0) target = $region5
    $region4: #{mlp_pred_pallas.1} parent=1 // pred_region
      %s16 = ssub.s32 256, 256
      %17 = vsyncadd [#allocation3], %s16
      %s18 = sshll.u32 [#allocation2], 4
      %s19 = int_to_ptr.vmem [resolvable:$true] %s18
      %24 = dma.hbm_to_vmem [thread:$0]  %s0, 256, %s19, [#allocation3], 128, 128, 8
    $region5: #{mlp_pred_pallas.1} parent=1 // pred_fallthru
      _
    // Predicated region
    $region6: #{mlp_pred_pallas.1} parent=1 // pred_check
      _
    $region7: #{mlp_pred_pallas.1} parent=1 // pred_check_branch
      %26 = sbr.rel (0) target = $region9
    $region8: #{mlp_pred_pallas.1} parent=1 // pred_region
      %s28 = ssub.s32 128, 128
      %29 = vsyncadd [#allocation5], %s28
      %s30 = sshll.u32 [#allocation4], 4
      %s31 = int_to_ptr.vmem [resolvable:$true] %s30
      %36 = dma.hbm_to_vmem [thread:$0]  %s1, 128, %s31, [#allocation5], 64, 64, 4
    $region9: #{mlp_pred_pallas.1} parent=1 // pred_fallthru
      _
    // Predicated region
    $region10: #{mlp_pred_pallas.1} parent=1 // pred_check
      _
    $region11: #{mlp_pred_pallas.1} parent=1 // pred_check_branch
      %38 = sbr.rel (0) target = $region13
    $region12: #{mlp_pred_pallas.1} parent=1 // pred_region
      %s40 = ssub.s32 1024, 1024
      %41 = vsyncadd [#allocation5], %s40
      %s42 = sshll.u32 [#allocation6], 4
      %s43 = int_to_ptr.vmem [resolvable:$true] %s42
      %48 = dma.hbm_to_vmem [thread:$0]  %s2, 1024, %s43, [#allocation5], 64, 64, 4
    $region13: #{mlp_pred_pallas.1} parent=1 // pred_fallthru
      _
    // Predicated region
    $region14: #{mlp_pred_pallas.1} parent=1 // pred_check
      _
    $region15: #{mlp_pred_pallas.1} parent=1 // pred_check_branch
      %50 = sbr.rel (0) target = $region17
    $region16: #{mlp_pred_pallas.1} parent=1 // pred_region
      %s52 = ssub.s32 1024, 1024
      %53 = vsyncadd [#allocation8], %s52
      %s54 = sshll.u32 [#allocation7], 4
      %s55 = int_to_ptr.vmem [resolvable:$true] %s54
      %60 = dma.hbm_to_vmem [thread:$0]  %s3, 1024, %s55, [#allocation8], 64, 64, 4
    $region17: #{mlp_pred_pallas.1} parent=1 // pred_fallthru
      _
    // Predicated region
    $region18: #{mlp_pred_pallas.1} parent=1 // pred_check
      _
    $region19: #{mlp_pred_pallas.1} parent=1 // pred_check_branch
      %62 = sbr.rel (0) target = $region21
    $region20: #{mlp_pred_pallas.1} parent=1 // pred_region
      %s64 = ssub.s32 128, 128
      %65 = vsyncadd [#allocation8], %s64
      %s67 = sshll.u32 [#allocation9], 4
      %s68 = int_to_ptr.vmem [resolvable:$true] %s67
      %70 = dma.hbm_to_vmem [thread:$0]  %s4, 128, %s68, [#allocation8]
    $region21: #{mlp_pred_pallas.1} parent=1 // pred_fallthru
      _
    // Predicated region
    $region22: #{mlp_pred_pallas.1} parent=1 // pred_check
      _
    $region23: #{mlp_pred_pallas.1} parent=1 // pred_check_branch
      %72 = sbr.rel (0) target = $region25
    $region24: #{mlp_pred_pallas.1} parent=1 // pred_region
      %73 = dma.done [#allocation3], 256
    $region25: #{mlp_pred_pallas.1} parent=1 // pred_fallthru
      _
    // Predicated region
    $region26: #{mlp_pred_pallas.1} parent=1 // pred_check
      _
    $region27: #{mlp_pred_pallas.1} parent=1 // pred_check_branch
      %75 = sbr.rel (0) target = $region29
    $region28: #{mlp_pred_pallas.1} parent=1 // pred_region
      %76 = dma.done [#allocation5], 128
    $region29: #{mlp_pred_pallas.1} parent=1 // pred_fallthru
      _
    // Predicated region
    $region30: #{mlp_pred_pallas.1} parent=1 // pred_check
      _
    $region31: #{mlp_pred_pallas.1} parent=1 // pred_check_branch
      %78 = sbr.rel (0) target = $region33
    $region32: #{mlp_pred_pallas.1} parent=1 // pred_region
      %79 = dma.done [#allocation5], 1024
    $region33: #{mlp_pred_pallas.1} parent=1 // pred_fallthru
      _
    // Predicated region
    $region34: #{mlp_pred_pallas.1} parent=1 // pred_check
      _
    $region35: #{mlp_pred_pallas.1} parent=1 // pred_check_branch
      %81 = sbr.rel (0) target = $region37
    $region36: #{mlp_pred_pallas.1} parent=1 // pred_region
      %82 = dma.done [#allocation8], 1024
    $region37: #{mlp_pred_pallas.1} parent=1 // pred_fallthru
      _
    // Predicated region
    $region38: #{mlp_pred_pallas.1} parent=1 // pred_check
      _
    $region39: #{mlp_pred_pallas.1} parent=1 // pred_check_branch
      %84 = sbr.rel (0) target = $region41
    $region40: #{mlp_pred_pallas.1} parent=1 // pred_region
      %85 = dma.done [#allocation8], 128
    $region41: #{mlp_pred_pallas.1} parent=1 // pred_fallthru
      _
    %v87 = vld [vmem:[#allocation2] sm:$0xff]
    %v88 = vld [vmem:[#allocation2 + $0x8] sm:$0xff]
    %v89 = vpack.c.bf16 %v88, %v87
    %v90 = vld [vmem:[#allocation9] sm:$0x1]
    %v91 = vld [vmem:[#allocation9 + $0x1] sm:$0x1]
    %v92 = vld [vmem:[#allocation9 + $0x2] sm:$0x1]
    %v93 = vld [vmem:[#allocation9 + $0x3] sm:$0x1]
    %v94 = vld [vmem:[#allocation9 + $0x4] sm:$0x1]
    %v95 = vld [vmem:[#allocation4] sm:$0xf]
    %v96 = vld [vmem:[#allocation4 + $0x4] sm:$0xf]
    %v99 = vunpack.c.l.b16 %v95
    %v100 = vunpack.c.l.b16 %v96
    %v101 = vpack.c.b16 %v100, %v99
    %vm103 = vcmask 130048
    %v105 = vsel %vm103, %v89, 0
    %107 = vmatprep.subr.bf16.mxu0 0
    %108 = vmatpush1.bf16.msra.mxu0 0
    %109 = vmatprep.subr.bf16.mxu0 0
    %110 = vmatpush1.bf16.msra.mxu0 0
    %111 = vmatprep.subr.bf16.mxu0 0
    %112 = vmatpush1.bf16.msra.mxu0 0
    %113 = vmatprep.subr.bf16.mxu0 0
    %114 = vmatpush1.bf16.msra.mxu0 0
    %115 = vmatprep.subr.bf16.mxu0 0
    %116 = vmatpush1.bf16.msra.mxu0 0
    %117 = vmatprep.subr.bf16.mxu0 0
    %118 = vmatpush1.bf16.msra.mxu0 0
    %119 = vmatprep.subr.bf16.mxu0 0
    %120 = vmatpush1.bf16.msra.mxu0 0
    %121 = vmatprep.subr.bf16.mxu0 0
    %122 = vmatpush1.bf16.msra.mxu0 %v101
    %123 = vmatprep.subr.bf16.mxu0 0
    %124 = vmatpush2.bf16.msra.mxu0 0
    %125 = vmatprep.subr.bf16.mxu0 0
    %126 = vmatpush2.bf16.msra.mxu0 0
    %127 = vmatprep.subr.bf16.mxu0 0
    %128 = vmatpush2.bf16.msra.mxu0 0
    %129 = vmatprep.subr.bf16.mxu0 0
    %130 = vmatpush2.bf16.msra.mxu0 0
    %131 = vmatprep.subr.bf16.mxu0 0
    %132 = vmatpush2.bf16.msra.mxu0 0
    %133 = vmatprep.subr.bf16.mxu0 0
    %134 = vmatpush2.bf16.msra.mxu0 0
    %135 = vmatprep.subr.bf16.mxu0 0
    %136 = vmatpush2.bf16.msra.mxu0 0
    %137 = vmatprep.subr.bf16.mxu0 0
    %138 = vmatpush2.bf16.msra.mxu0 0
    %139 = vmatprep.mubr.bf16.mxu0 0
    %140 = vmatmul.mubr.bf16.gmra.mxu0 %v105
    %v141 = vpop.f32.mrf.mxu0
    %v142 = vadd.f32 0.0, %v141
    %v143 = vpop.f32.mrf.mxu0
    %v144 = vpop.f32.mrf.mxu0
    %v145 = vadd.f32 0.0, %v144
    %v146 = vpop.f32.mrf.mxu0
    %147 = vdwg.mxu0
    %v148 = vadd.f32 %v142, %v145
    %v149 = vrot.slane %v148, 4
    %v150 = vadd.f32 %v148, %v149
    %v151 = vrot.slane %v150, 2
    %v152 = vadd.f32 %v150, %v151
    %v153 = vrot.slane %v152, 1
    %v154 = vadd.f32 %v152, %v153
    %v155 = vmul.f32 %v154, 0.0625
    %v156 = vmul.f32 %v142, %v142
    %v157 = vmul.f32 %v145, %v145
    %v158 = vadd.f32 %v156, %v157
    %v159 = vrot.slane %v158, 4
    %v160 = vadd.f32 %v158, %v159
    %v161 = vrot.slane %v160, 2
    %v162 = vadd.f32 %v160, %v161
    %v163 = vrot.slane %v162, 1
    %v164 = vadd.f32 %v162, %v163
    %v165 = vmul.f32 %v164, 0.0625
    %v166 = vmul.f32 %v155, %v155
    %v167 = vsub.f32 %v165, %v166
    %v168 = vmax.f32 %v167, 0.0
    %v169 = vadd.f32 %v168, 1e-05
    %v170 = vrsqrt.pop %v169
    %v171 = vmul.f32 %v90, %v170
    %v172 = vmul.f32 %v155, %v171
    %v173 = vsub.f32 %v91, %v172
    %v174 = vlaneseq
    %v175 = vshrl.u32 %v174, 7
    %v176 = vsub.s32 0, %v175
    %v177 = vrot.slane %v171, %v176
    %v178 = vmul.f32 %v142, %v177
    %v179 = vmul.f32 %v145, %v177
    %v180 = vlaneseq
    %v181 = vshrl.u32 %v180, 7
    %v182 = vsub.s32 0, %v181
    %v183 = vrot.slane %v173, %v182
    %v184 = vadd.f32 %v178, %v183
    %v185 = vadd.f32 %v179, %v183
    %v186 = vmax.f32 %v184, 0.0
    %v187 = vmax.f32 %v185, 0.0
    %v188 = vpack.c.bf16 %v187, %v186
    %v189 = vld [vmem:[#allocation6] sm:$0xf]
    %v190 = vld [vmem:[#allocation6 + $0x4] sm:$0xf]
    %v191 = vld [vmem:[#allocation6 + $0x8] sm:$0xf]
    %v192 = vld [vmem:[#allocation6 + $0xc] sm:$0xf]
    %v193 = vld [vmem:[#allocation6 + $0x10] sm:$0xf]
    %v194 = vld [vmem:[#allocation6 + $0x14] sm:$0xf]
    %v195 = vld [vmem:[#allocation6 + $0x18] sm:$0xf]
    %v196 = vld [vmem:[#allocation6 + $0x1c] sm:$0xf]
    %v197 = vld [vmem:[#allocation6 + $0x20] sm:$0xf]
    %v198 = vld [vmem:[#allocation6 + $0x24] sm:$0xf]
    %v199 = vld [vmem:[#allocation6 + $0x28] sm:$0xf]
    %v200 = vld [vmem:[#allocation6 + $0x2c] sm:$0xf]
    %v201 = vld [vmem:[#allocation6 + $0x30] sm:$0xf]
    %v202 = vld [vmem:[#allocation6 + $0x34] sm:$0xf]
    %v203 = vld [vmem:[#allocation6 + $0x38] sm:$0xf]
    %v204 = vld [vmem:[#allocation6 + $0x3c] sm:$0xf]
    %v221 = vunpack.c.l.b16 %v189
    %v222 = vunpack.c.l.b16 %v190
    %v223 = vunpack.c.l.b16 %v191
    %v224 = vunpack.c.l.b16 %v192
    %v225 = vunpack.c.l.b16 %v193
    %v226 = vunpack.c.l.b16 %v194
    %v227 = vunpack.c.l.b16 %v195
    %v228 = vunpack.c.l.b16 %v196
    %v229 = vunpack.c.l.b16 %v197
    %v230 = vunpack.c.l.b16 %v198
    %v231 = vunpack.c.l.b16 %v199
    %v232 = vunpack.c.l.b16 %v200
    %v233 = vunpack.c.l.b16 %v201
    %v234 = vunpack.c.l.b16 %v202
    %v235 = vunpack.c.l.b16 %v203
    %v236 = vunpack.c.l.b16 %v204
    %v237 = vpack.c.b16 %v222, %v221
    %v238 = vpack.c.b16 %v224, %v223
    %v239 = vpack.c.b16 %v226, %v225
    %v240 = vpack.c.b16 %v228, %v227
    %v241 = vpack.c.b16 %v230, %v229
    %v242 = vpack.c.b16 %v232, %v231
    %v243 = vpack.c.b16 %v234, %v233
    %v244 = vpack.c.b16 %v236, %v235
    %253 = vmatprep.subr.bf16.mxu0 0
    %254 = vmatpush1.bf16.msra.mxu0 %v244
    %255 = vmatprep.subr.bf16.mxu0 0
    %256 = vmatpush1.bf16.msra.mxu0 %v243
    %257 = vmatprep.subr.bf16.mxu0 0
    %258 = vmatpush1.bf16.msra.mxu0 %v242
    %259 = vmatprep.subr.bf16.mxu0 0
    %260 = vmatpush1.bf16.msra.mxu0 %v241
    %261 = vmatprep.subr.bf16.mxu0 0
    %262 = vmatpush1.bf16.msra.mxu0 %v240
    %263 = vmatprep.subr.bf16.mxu0 0
    %264 = vmatpush1.bf16.msra.mxu0 %v239
    %265 = vmatprep.subr.bf16.mxu0 0
    %266 = vmatpush1.bf16.msra.mxu0 %v238
    %267 = vmatprep.subr.bf16.mxu0 0
    %268 = vmatpush1.bf16.msra.mxu0 %v237
    %269 = vmatprep.subr.bf16.mxu0 0
    %270 = vmatpush2.bf16.msra.mxu0 0
    %271 = vmatprep.subr.bf16.mxu0 0
    %272 = vmatpush2.bf16.msra.mxu0 0
    %273 = vmatprep.subr.bf16.mxu0 0
    %274 = vmatpush2.bf16.msra.mxu0 0
    %275 = vmatprep.subr.bf16.mxu0 0
    %276 = vmatpush2.bf16.msra.mxu0 0
    %277 = vmatprep.subr.bf16.mxu0 0
    %278 = vmatpush2.bf16.msra.mxu0 0
    %279 = vmatprep.subr.bf16.mxu0 0
    %280 = vmatpush2.bf16.msra.mxu0 0
    %281 = vmatprep.subr.bf16.mxu0 0
    %282 = vmatpush2.bf16.msra.mxu0 0
    %283 = vmatprep.subr.bf16.mxu0 0
    %284 = vmatpush2.bf16.msra.mxu0 0
    %285 = vmatprep.mubr.bf16.mxu0 0
    %286 = vmatmul.mubr.bf16.gmra.mxu0 %v188
    %v287 = vpop.f32.mrf.mxu0
    %v288 = vadd.f32 0.0, %v287
    %v289 = vpop.f32.mrf.mxu0
    %v290 = vpop.f32.mrf.mxu0
    %v291 = vadd.f32 0.0, %v290
    %v292 = vpop.f32.mrf.mxu0
    %293 = vdwg.mxu0
    %v294 = vadd.f32 %v288, %v291
    %v295 = vrot.slane %v294, 4
    %v296 = vadd.f32 %v294, %v295
    %v297 = vrot.slane %v296, 2
    %v298 = vadd.f32 %v296, %v297
    %v299 = vrot.slane %v298, 1
    %v300 = vadd.f32 %v298, %v299
    %v301 = vmul.f32 %v300, 0.0625
    %v302 = vmul.f32 %v288, %v288
    %v303 = vmul.f32 %v291, %v291
    %v304 = vadd.f32 %v302, %v303
    %v305 = vrot.slane %v304, 4
    %v306 = vadd.f32 %v304, %v305
    %v307 = vrot.slane %v306, 2
    %v308 = vadd.f32 %v306, %v307
    %v309 = vrot.slane %v308, 1
    %v310 = vadd.f32 %v308, %v309
    %v311 = vmul.f32 %v310, 0.0625
    %v312 = vmul.f32 %v301, %v301
    %v313 = vsub.f32 %v311, %v312
    %v314 = vmax.f32 %v313, 0.0
    %v315 = vadd.f32 %v314, 1e-05
    %v316 = vrsqrt.pop %v315
    %v317 = vmul.f32 %v92, %v316
    %v318 = vmul.f32 %v301, %v317
    %v319 = vsub.f32 %v93, %v318
    %v320 = vlaneseq
    %v321 = vshrl.u32 %v320, 7
    %v322 = vsub.s32 0, %v321
    %v323 = vrot.slane %v317, %v322
    %v324 = vmul.f32 %v288, %v323
    %v325 = vmul.f32 %v291, %v323
    %v326 = vlaneseq
    %v327 = vshrl.u32 %v326, 7
    %v328 = vsub.s32 0, %v327
    %v329 = vrot.slane %v319, %v328
    %v330 = vadd.f32 %v324, %v329
    %v331 = vadd.f32 %v325, %v329
    %v332 = vmax.f32 %v330, 0.0
    %v333 = vmax.f32 %v331, 0.0
    %v334 = vpack.c.bf16 %v333, %v332
    %v335 = vld [vmem:[#allocation7] sm:$0xf]
    %v336 = vld [vmem:[#allocation7 + $0x4] sm:$0xf]
    %v337 = vld [vmem:[#allocation7 + $0x8] sm:$0xf]
    %v338 = vld [vmem:[#allocation7 + $0xc] sm:$0xf]
    %v339 = vld [vmem:[#allocation7 + $0x10] sm:$0xf]
    %v340 = vld [vmem:[#allocation7 + $0x14] sm:$0xf]
    %v341 = vld [vmem:[#allocation7 + $0x18] sm:$0xf]
    %v342 = vld [vmem:[#allocation7 + $0x1c] sm:$0xf]
    %v343 = vld [vmem:[#allocation7 + $0x20] sm:$0xf]
    %v344 = vld [vmem:[#allocation7 + $0x24] sm:$0xf]
    %v345 = vld [vmem:[#allocation7 + $0x28] sm:$0xf]
    %v346 = vld [vmem:[#allocation7 + $0x2c] sm:$0xf]
    %v347 = vld [vmem:[#allocation7 + $0x30] sm:$0xf]
    %v348 = vld [vmem:[#allocation7 + $0x34] sm:$0xf]
    %v349 = vld [vmem:[#allocation7 + $0x38] sm:$0xf]
    %v350 = vld [vmem:[#allocation7 + $0x3c] sm:$0xf]
    %v351 = vlaneseq
    %v352 = vshrl.u32 %v351, 7
    %v353 = vsub.s32 0, %v352
    %v354 = vrot.slane %v94, %v353
    %v371 = vunpack.c.l.b16 %v335
    %v372 = vunpack.c.l.b16 %v336
    %v373 = vunpack.c.l.b16 %v337
    %v374 = vunpack.c.l.b16 %v338
    %v375 = vunpack.c.l.b16 %v339
    %v376 = vunpack.c.l.b16 %v340
    %v377 = vunpack.c.l.b16 %v341
    %v378 = vunpack.c.l.b16 %v342
    %v379 = vunpack.c.l.b16 %v343
    %v380 = vunpack.c.l.b16 %v344
    %v381 = vunpack.c.l.b16 %v345
    %v382 = vunpack.c.l.b16 %v346
    %v383 = vunpack.c.l.b16 %v347
    %v384 = vunpack.c.l.b16 %v348
    %v385 = vunpack.c.l.b16 %v349
    %v386 = vunpack.c.l.b16 %v350
    %v387 = vpack.c.b16 %v372, %v371
    %v388 = vpack.c.b16 %v374, %v373
    %v389 = vpack.c.b16 %v376, %v375
    %v390 = vpack.c.b16 %v378, %v377
    %v391 = vpack.c.b16 %v380, %v379
    %v392 = vpack.c.b16 %v382, %v381
    %v393 = vpack.c.b16 %v384, %v383
    %v394 = vpack.c.b16 %v386, %v385
    %403 = vmatprep.subr.bf16.mxu0 0
    %404 = vmatpush1.bf16.msra.mxu0 %v394
    %405 = vmatprep.subr.bf16.mxu0 0
    %406 = vmatpush1.bf16.msra.mxu0 %v393
    %407 = vmatprep.subr.bf16.mxu0 0
    %408 = vmatpush1.bf16.msra.mxu0 %v392
    %409 = vmatprep.subr.bf16.mxu0 0
    %410 = vmatpush1.bf16.msra.mxu0 %v391
    %411 = vmatprep.subr.bf16.mxu0 0
    %412 = vmatpush1.bf16.msra.mxu0 %v390
    %413 = vmatprep.subr.bf16.mxu0 0
    %414 = vmatpush1.bf16.msra.mxu0 %v389
    %415 = vmatprep.subr.bf16.mxu0 0
    %416 = vmatpush1.bf16.msra.mxu0 %v388
    %417 = vmatprep.subr.bf16.mxu0 0
    %418 = vmatpush1.bf16.msra.mxu0 %v387
    %419 = vmatprep.subr.bf16.mxu0 0
    %420 = vmatpush2.bf16.msra.mxu0 0
    %421 = vmatprep.subr.bf16.mxu0 0
    %422 = vmatpush2.bf16.msra.mxu0 0
    %423 = vmatprep.subr.bf16.mxu0 0
    %424 = vmatpush2.bf16.msra.mxu0 0
    %425 = vmatprep.subr.bf16.mxu0 0
    %426 = vmatpush2.bf16.msra.mxu0 0
    %427 = vmatprep.subr.bf16.mxu0 0
    %428 = vmatpush2.bf16.msra.mxu0 0
    %429 = vmatprep.subr.bf16.mxu0 0
    %430 = vmatpush2.bf16.msra.mxu0 0
    %431 = vmatprep.subr.bf16.mxu0 0
    %432 = vmatpush2.bf16.msra.mxu0 0
    %433 = vmatprep.subr.bf16.mxu0 0
    %434 = vmatpush2.bf16.msra.mxu0 0
    %435 = vmatprep.mubr.bf16.mxu0 0
    %436 = vmatmul.mubr.bf16.gmra.mxu0 %v334
    %v437 = vpop.f32.mrf.mxu0
    %v438 = vadd.f32 %v354, %v437
    %v439 = vpop.f32.mrf.mxu0
    %v440 = vpop.f32.mrf.mxu0
    %v441 = vadd.f32 %v354, %v440
    %v442 = vpop.f32.mrf.mxu0
    %443 = vdwg.mxu0
    %444 = vst [vmem:[%s5] sm:$0xff] %v438
    %445 = vst [vmem:[%s5 + $0x8] sm:$0xff] %v441
    // Predicated region
    $region42: #{mlp_pred_pallas.1} parent=1 // pred_check
      _
    $region43: #{mlp_pred_pallas.1} parent=1 // pred_check_branch
      %447 = sbr.rel (0) target = $region45
    $region44: #{mlp_pred_pallas.1} parent=1 // pred_region
      _
    $region45: #{mlp_pred_pallas.1} parent=1 // pred_fallthru
      _
    // Predicated region
    $region46: #{mlp_pred_pallas.1} parent=1 // pred_check
      _
    $region47: #{mlp_pred_pallas.1} parent=1 // pred_check_branch
      %449 = sbr.rel (0) target = $region49
    $region48: #{mlp_pred_pallas.1} parent=1 // pred_region
      _
    $region49: #{mlp_pred_pallas.1} parent=1 // pred_fallthru
      _
    %450 = vsyncpa [#allocation3], 1
    %451 = vsyncpa [#allocation5], 1
    %452 = vsyncpa [#allocation8], 1

</llo_original>
